<compile_context>
chip_gen: v7x
topology: tpu7x:2x2x1
jax: 0.10.0
libtpu: 0.0.40
codegen_flags: <defaults>
</compile_context>

<pallas_src>
import functools

import jax
import jax.numpy as jnp
from jax.experimental import pallas as pl
from jax.experimental.pallas import tpu as pltpu

_LANES = 128
_MAX_TILE_ROWS = 2048  # (2048,128) f32 block = 1 MiB; x3 inputs x2 buffers = 6 MiB VMEM


def _uncertain_loss_kernel(p_ref, u_ref, t_ref, out_ref, acc_ref, *,
                           n, n_last, tile_rows, acc_rows):
    i = pl.program_id(0)
    last = pl.num_programs(0) - 1

    @pl.when(i == 0)
    def _init():
        acc_ref[...] = jnp.zeros_like(acc_ref)

    p = p_ref[...].astype(jnp.float32)
    u = u_ref[...].astype(jnp.float32)
    t = t_ref[...].astype(jnp.float32)
    u2 = u * u
    d = p - t
    term = d * d / u2 + u2                                   # (tile_rows, 128)

    ratio = tile_rows // acc_rows

    def _reduce(x):
        # Fold the tile into the (acc_rows, 128) accumulator shape with pure
        # vreg adds (no cross-lane work in the steady state).
        if ratio == 1:
            return x
        return x.reshape(ratio, acc_rows, _LANES).sum(axis=0)

    needs_mask = n_last < tile_rows * _LANES                 # static Python bool

    if needs_mask:
        @pl.when(i < last)
        def _bulk():
            acc_ref[...] += _reduce(term)

        @pl.when(i == last)
        def _tail():
            # Tile-local flat index; int32-safe (max tile_rows*128 = 262144).
            row = jax.lax.broadcasted_iota(jnp.int32, (tile_rows, _LANES), 0)
            col = jax.lax.broadcasted_iota(jnp.int32, (tile_rows, _LANES), 1)
            local = row * _LANES + col
            acc_ref[...] += _reduce(jnp.where(local < n_last, term, 0.0))
    else:
        acc_ref[...] += _reduce(term)

    @pl.when(i == last)
    def _finalize():
        out_ref[0] = jnp.sum(acc_ref[...]) / jnp.float32(n)


def uncertain_regression_loss(predict, uncertainty, target):
    """loss = sum((predict - target)^2 / uncertainty^2 + uncertainty^2) / N."""
    assert predict.ndim == 1 and uncertainty.ndim == 1 and target.ndim == 1
    n = predict.shape[0]
    assert uncertainty.shape[0] == n and target.shape[0] == n
    assert n > 0

    rows = -(-n // _LANES)
    if n % _LANES == 0:
        # Fast path: pure reshape, no extra HBM traffic.
        p2 = predict.reshape(rows, _LANES)
        u2 = uncertainty.reshape(rows, _LANES)
        t2 = target.reshape(rows, _LANES)
    else:
        # Ragged tail: pad only to the next lane multiple (< 128 elements).
        # uncertainty padded with 1.0 keeps padded lanes finite (masked anyway).
        pad = rows * _LANES - n
        p2 = jnp.pad(predict, (0, pad)).reshape(rows, _LANES)
        u2 = jnp.pad(uncertainty, (0, pad), constant_values=1.0).reshape(rows, _LANES)
        t2 = jnp.pad(target, (0, pad)).reshape(rows, _LANES)

    # Biggest sublane-aligned tile <= rows, capped so three double-buffered
    # inputs stay well under every generation's scoped-VMEM default.
    if rows < 8:
        tile_rows = rows                       # full-extent block (always legal)
    else:
        tile_rows = min(_MAX_TILE_ROWS, (rows // 8) * 8)
    acc_rows = min(tile_rows, 8)
    grid_len = -(-rows // tile_rows)
    n_last = n - (grid_len - 1) * tile_rows * _LANES  # valid elems in last block

    kernel = functools.partial(
        _uncertain_loss_kernel,
        n=n, n_last=n_last, tile_rows=tile_rows, acc_rows=acc_rows)

    itemsize = jnp.dtype(predict.dtype).itemsize
    out = pl.pallas_call(
        kernel,
        out_shape=jax.ShapeDtypeStruct((1,), jnp.float32),
        grid_spec=pltpu.PrefetchScalarGridSpec(
            num_scalar_prefetch=0,
            grid=(grid_len,),
            in_specs=[
                pl.BlockSpec((tile_rows, _LANES), lambda i: (i, 0)),
                pl.BlockSpec((tile_rows, _LANES), lambda i: (i, 0)),
                pl.BlockSpec((tile_rows, _LANES), lambda i: (i, 0)),
            ],
            out_specs=pl.BlockSpec(memory_space=pltpu.MemorySpace.SMEM),
            scratch_shapes=[pltpu.VMEM((acc_rows, _LANES), jnp.float32)],
        ),
        compiler_params=pltpu.CompilerParams(
            dimension_semantics=("arbitrary",)),   # sequential accumulation axis
        cost_estimate=pl.CostEstimate(
            flops=6 * n,
            transcendentals=0,
            bytes_accessed=3 * rows * _LANES * itemsize + 4),
    )(p2, u2, t2)
    return out[0]


def _uncertain_regression_loss_ref(predict, uncertainty, target):
    # Pure-JAX reference mirroring the PyTorch module.
    n = predict.shape[0]
    p = predict.astype(jnp.float32)
    u = uncertainty.astype(jnp.float32)
    t = target.astype(jnp.float32)
    return jnp.sum((p - t) ** 2 / u ** 2 + u ** 2) / n


if __name__ == "__main__":
    key = jax.random.PRNGKey(0)
    # n=200: tiny ragged (pad path, rows<8); n=1024: lane-aligned, unmasked path;
    # n=3200: lane-aligned, multi-step grid with ragged last block (mask path).
    for n in (200, 1024, 3200):
        k1, k2, k3 = jax.random.split(jax.random.fold_in(key, n), 3)
        predict = jax.random.normal(k1, (n,), dtype=jnp.float32)
        target = jax.random.normal(k2, (n,), dtype=jnp.float32)
        uncertainty = 0.5 + jnp.abs(jax.random.normal(k3, (n,), dtype=jnp.float32))

        loss = uncertain_regression_loss(predict, uncertainty, target)
        jax.block_until_ready(loss)

        ref = _uncertain_regression_loss_ref(predict, uncertainty, target)
        assert jnp.allclose(loss, ref, rtol=1e-5, atol=1e-6), (n, loss, ref)

    print("KERNEL_OK")
</pallas_src>

<mosaic_0001>
module attributes {stable_mosaic.version = 11 : i64} {
  func.func @_uncertain_loss_kernel(%arg0: i32, %arg1: memref<2x128xf32, #tpu.memory_space<vmem>>, %arg2: memref<2x128xf32, #tpu.memory_space<vmem>>, %arg3: memref<2x128xf32, #tpu.memory_space<vmem>>, %arg4: memref<1xf32, #tpu.memory_space<smem>>, %arg5: memref<2x128xf32, #tpu.memory_space<vmem>>) attributes {dimension_semantics = [#tpu.dimension_semantics<arbitrary>], iteration_bounds = array<i64: 1>, scalar_prefetch = 0 : i64, scratch_operands = 1 : i64, tpu.core_type = #tpu.core_type<tc>, window_params = [{transform_indices = @transform_0, window_bounds = array<i64: 2, 128>}, {transform_indices = @transform_1, window_bounds = array<i64: 2, 128>}, {transform_indices = @transform_2, window_bounds = array<i64: 2, 128>}, {transform_indices = @transform_3, window_bounds = array<i64: 1>}]} {
    %c0_i32 = arith.constant 0 : i32
    %0 = arith.cmpi eq, %arg0, %c0_i32 : i32
    %1 = arith.extui %0 : i1 to i32
    %c0_i32_0 = arith.constant 0 : i32
    %2 = arith.cmpi ne, %1, %c0_i32_0 : i32
    scf.if %2 {
      %cst = arith.constant 0.000000e+00 : f32
      %20 = vector.broadcast %cst : f32 to vector<2x128xf32>
      %c0_12 = arith.constant 0 : index
      %c0_13 = arith.constant 0 : index
      %21 = vector.load %arg5[%c0_12, %c0_13] : memref<2x128xf32, #tpu.memory_space<vmem>>, vector<2x128xf32>
      tpu.vector_store %arg5[%c0_12, %c0_13], %20 {strides = array<i32>} : memref<2x128xf32, #tpu.memory_space<vmem>>, vector<2x128xf32>,
    } else {
    }
    %c0 = arith.constant 0 : index
    %c0_1 = arith.constant 0 : index
    %3 = vector.load %arg1[%c0, %c0_1] : memref<2x128xf32, #tpu.memory_space<vmem>>, vector<2x128xf32>
    %c0_2 = arith.constant 0 : index
    %c0_3 = arith.constant 0 : index
    %4 = vector.load %arg2[%c0_2, %c0_3] : memref<2x128xf32, #tpu.memory_space<vmem>>, vector<2x128xf32>
    %c0_4 = arith.constant 0 : index
    %c0_5 = arith.constant 0 : index
    %5 = vector.load %arg3[%c0_4, %c0_5] : memref<2x128xf32, #tpu.memory_space<vmem>>, vector<2x128xf32>
    %6 = arith.mulf %4, %4 : vector<2x128xf32>
    %7 = arith.subf %3, %5 : vector<2x128xf32>
    %8 = arith.mulf %7, %7 : vector<2x128xf32>
    %9 = arith.divf %8, %6 : vector<2x128xf32>
    %10 = arith.addf %9, %6 : vector<2x128xf32>
    %c0_i32_6 = arith.constant 0 : i32
    %11 = arith.cmpi slt, %arg0, %c0_i32_6 : i32
    %12 = arith.extui %11 : i1 to i32
    %c0_i32_7 = arith.constant 0 : i32
    %13 = arith.cmpi ne, %12, %c0_i32_7 : i32
    scf.if %13 {
      %c0_12 = arith.constant 0 : index
      %c0_13 = arith.constant 0 : index
      %20 = vector.load %arg5[%c0_12, %c0_13] : memref<2x128xf32, #tpu.memory_space<vmem>>, vector<2x128xf32>
      %21 = arith.addf %20, %10 : vector<2x128xf32>
      %c0_14 = arith.constant 0 : index
      %c0_15 = arith.constant 0 : index
      %22 = vector.load %arg5[%c0_14, %c0_15] : memref<2x128xf32, #tpu.memory_space<vmem>>, vector<2x128xf32>
      tpu.vector_store %arg5[%c0_14, %c0_15], %21 {strides = array<i32>} : memref<2x128xf32, #tpu.memory_space<vmem>>, vector<2x128xf32>,
    } else {
    }
    %c0_i32_8 = arith.constant 0 : i32
    %14 = arith.cmpi eq, %arg0, %c0_i32_8 : i32
    %15 = arith.extui %14 : i1 to i32
    %c0_i32_9 = arith.constant 0 : i32
    %16 = arith.cmpi ne, %15, %c0_i32_9 : i32
    scf.if %16 {
      %20 = tpu.iota {dimensions = array<i32: 0>} : vector<2x128xi32>
      %21 = tpu.iota {dimensions = array<i32: 1>} : vector<2x128xi32>
      %c128_i32 = arith.constant 128 : i32
      %22 = vector.broadcast %c128_i32 : i32 to vector<2x128xi32>
      %23 = arith.muli %20, %22 : vector<2x128xi32>
      %24 = arith.addi %23, %21 : vector<2x128xi32>
      %c0_12 = arith.constant 0 : index
      %c0_13 = arith.constant 0 : index
      %25 = vector.load %arg5[%c0_12, %c0_13] : memref<2x128xf32, #tpu.memory_space<vmem>>, vector<2x128xf32>
      %c200_i32 = arith.constant 200 : i32
      %26 = vector.broadcast %c200_i32 : i32 to vector<2x128xi32>
      %27 = arith.cmpi slt, %24, %26 : vector<2x128xi32>
      %cst = arith.constant 0.000000e+00 : f32
      %28 = vector.broadcast %cst : f32 to vector<2x128xf32>
      %29 = arith.select %27, %10, %28 : vector<2x128xi1>, vector<2x128xf32>
      %30 = arith.addf %25, %29 : vector<2x128xf32>
      %c0_14 = arith.constant 0 : index
      %c0_15 = arith.constant 0 : index
      %31 = vector.load %arg5[%c0_14, %c0_15] : memref<2x128xf32, #tpu.memory_space<vmem>>, vector<2x128xf32>
      tpu.vector_store %arg5[%c0_14, %c0_15], %30 {strides = array<i32>} : memref<2x128xf32, #tpu.memory_space<vmem>>, vector<2x128xf32>,
    } else {
    }
    %c0_i32_10 = arith.constant 0 : i32
    %17 = arith.cmpi eq, %arg0, %c0_i32_10 : i32
    %18 = arith.extui %17 : i1 to i32
    %c0_i32_11 = arith.constant 0 : i32
    %19 = arith.cmpi ne, %18, %c0_i32_11 : i32
    scf.if %19 {
      %c0_12 = arith.constant 0 : index
      %c0_13 = arith.constant 0 : index
      %20 = vector.load %arg5[%c0_12, %c0_13] : memref<2x128xf32, #tpu.memory_space<vmem>>, vector<2x128xf32>
      %21 = vector.shape_cast %20 : vector<2x128xf32> to vector<1x2x128xf32>
      %cst = arith.constant dense<0.000000e+00> : vector<1xf32>
      %22 = vector.multi_reduction <add>, %21, %cst [1, 2] : vector<1x2x128xf32> to vector<1xf32>
      %23 = vector.shape_cast %22 : vector<1xf32> to vector<1x1x1xf32>
      %24 = vector.extract %23[0, 0, 0] : f32 from vector<1x1x1xf32>
      %cst_14 = arith.constant 2.000000e+02 : f32
      %25 = arith.divf %24, %cst_14 : f32
      %c0_15 = arith.constant 0 : index
      %26 = memref.load %arg4[%c0_15] : memref<1xf32, #tpu.memory_space<smem>>
      memref.store %25, %arg4[%c0_15] : memref<1xf32, #tpu.memory_space<smem>>
    } else {
    }
    return
  }
  func.func @transform_0(%arg0: i32) -> (i32, i32) {
    %c0_i32 = arith.constant 0 : i32
    %c0_i32_0 = arith.constant 0 : i32
    return %arg0, %c0_i32 : i32, i32
  }
  func.func @transform_1(%arg0: i32) -> (i32, i32) {
    %c0_i32 = arith.constant 0 : i32
    %c0_i32_0 = arith.constant 0 : i32
    return %arg0, %c0_i32 : i32, i32
  }
  func.func @transform_2(%arg0: i32) -> (i32, i32) {
    %c0_i32 = arith.constant 0 : i32
    %c0_i32_0 = arith.constant 0 : i32
    return %arg0, %c0_i32 : i32, i32
  }
  func.func @transform_3(%arg0: i32) -> i32 {
    %c0_i32 = arith.constant 0 : i32
    %c0_i32_0 = arith.constant 0 : i32
    return %c0_i32 : i32
  }
}

</mosaic_0001>

<llo_original>
// kernel: tpu_custom_call.1
$region0: #{tpu_custom_call.1}
  #allocation0 [shape = 'u32[]', space=smem, size = 0x4, offset = 0x4, fixed_abs, tag = 'smem constant byte address 0x4 - core index']
  #allocation1 [shape = 'u32[144,128]{1,0:T(1,128)}', space=vmem, size = 0x12000, scoped, tag = 'internal scratch']
  #allocation2 [shape = 'f32[2,128]{1,0:T(2,128)}', space=vmem, size = 0x400, scoped, tag = 'scratch operand']
  %s0 = inlined_call_operand.hbm [shape: f32[2,128], index: 0, kind: input, shape index: {}]
  %s1 = inlined_call_operand.vmem [shape: f32[2,128], index: 1, kind: input, shape index: {}]
  %s2 = inlined_call_operand.vmem [shape: f32[2,128], index: 2, kind: input, shape index: {}]
  %s3 = inlined_call_operand.hbm [shape: f32[1], index: 3, kind: output, shape index: {}]
  %s4 = sld [smem:[#allocation0]]
  $region38: #{tpu_custom_call.1} parent=0
    _
  %s6 = ssub.s32 1, %s4
  %s7 = scalar_select 0, %s6, %s4
  $region1: #{tpu_custom_call.1} parent=0
    #allocation3 [shape = 'u8[1024]{0}', space=vmem, size = 0x400, scoped, tag = 'input window, operand 0, single buffered']
    #allocation4 [shape = 's32[1]{0}', space=sflag, size = 0x4, scoped, tag = 'scoped memory for tpu_custom_call.1']
    #allocation5 [shape = 's32[1]{0}', space=sflag, size = 0x4, scoped, tag = 'scoped memory for tpu_custom_call.1']
    #allocation6 [shape = 'u8[512]{0}', space=smem, size = 0x200, scoped, tag = 'output window, operand 0, single buffered']
    %8 = vsyncpa [#allocation4], 0
    %9 = vsyncpa [#allocation5], 0
    // Predicated region
    $region2: #{tpu_custom_call.1} parent=1 // pred_check
      _
    $region3: #{tpu_custom_call.1} parent=1 // pred_check_branch
      %11 = sbr.rel (0) target = $region5
    $region4: #{tpu_custom_call.1} parent=1 // pred_region
      %s13 = ssub.s32 32, 32
      %14 = vsyncadd [#allocation4], %s13
      %s16 = sshll.u32 [#allocation3], 4
      %s17 = int_to_ptr.vmem [resolvable:$true] %s16
      %19 = dma.hbm_to_vmem [thread:$0]  %s0, 32, %s17, [#allocation4]
    $region5: #{tpu_custom_call.1} parent=1 // pred_fallthru
      _
    // Predicated region
    $region6: #{tpu_custom_call.1} parent=1 // pred_check
      _
    $region7: #{tpu_custom_call.1} parent=1 // pred_check_branch
      %21 = sbr.rel (0) target = $region9
    $region8: #{tpu_custom_call.1} parent=1 // pred_region
      _
    $region9: #{tpu_custom_call.1} parent=1 // pred_fallthru
      _
    // Predicated region
    $region10: #{tpu_custom_call.1} parent=1 // pred_check
      _
    $region11: #{tpu_custom_call.1} parent=1 // pred_check_branch
      %23 = sbr.rel (0) target = $region13
    $region12: #{tpu_custom_call.1} parent=1 // pred_region
      _
    $region13: #{tpu_custom_call.1} parent=1 // pred_fallthru
      _
    // Predicated region
    $region14: #{tpu_custom_call.1} parent=1 // pred_check
      _
    $region15: #{tpu_custom_call.1} parent=1 // pred_check_branch
      %25 = sbr.rel (0) target = $region17
    $region16: #{tpu_custom_call.1} parent=1 // pred_region
      %26 = dma.done [#allocation4], 32
    $region17: #{tpu_custom_call.1} parent=1 // pred_fallthru
      _
    %p27 = scmp.eq.s32.totalorder 0, 0
    // Predicated region
    $region18: #{tpu_custom_call.1} parent=1 // pred_check
      %p28 = pneg %p27
    $region19: #{tpu_custom_call.1} parent=1 // pred_check_branch
      %30 = sbr.rel (%p28) target = $region21
    $region20: #{tpu_custom_call.1} parent=1 // pred_region
      %31 = vst [vmem:[#allocation2] sm:$0x3] 0.0
    $region21: #{tpu_custom_call.1} parent=1 // pred_fallthru
      _
    %v32 = vld [vmem:[#allocation3] sm:$0x3]
    %v33 = vld [vmem:[%s1] sm:$0x3]
    %v34 = vld [vmem:[%s2] sm:$0x3]
    %v35 = vmul.f32 %v33, %v33
    %v36 = vsub.f32 %v32, %v34
    %v37 = vmul.f32 %v36, %v36
    %v38 = vrcp.pop %v35
    %v39 = vmul.f32 %v37, %v38
    %v40 = vadd.f32 %v39, %v35
    %p41 = scmp.lt.s32.totalorder 0, 0
    // Predicated region
    $region22: #{tpu_custom_call.1} parent=1 // pred_check
      %p42 = pneg %p41
    $region23: #{tpu_custom_call.1} parent=1 // pred_check_branch
      %44 = sbr.rel (%p42) target = $region25
    $region24: #{tpu_custom_call.1} parent=1 // pred_region
      %v45 = vld [vmem:[#allocation2] sm:$0x3]
      %v46 = vadd.f32 %v45, %v40
      %47 = vst [vmem:[#allocation2] sm:$0x3] %v46
    $region25: #{tpu_custom_call.1} parent=1 // pred_fallthru
      _
    // Predicated region
    $region26: #{tpu_custom_call.1} parent=1 // pred_check
      %p48 = pneg %p27
    $region27: #{tpu_custom_call.1} parent=1 // pred_check_branch
      %50 = sbr.rel (%p48) target = $region29
    $region28: #{tpu_custom_call.1} parent=1 // pred_region
      %v51 = vlaneseq
      %v52 = vshrl.u32 %v51, 7
      %v53 = vlaneseq
      %v54 = vand.u32 %v53, 127
      %v55 = vmul.u32 %v52, 128
      %v56 = vadd.s32 %v55, %v54
      %v57 = vld [vmem:[#allocation2] sm:$0x3]
      %vm58 = vcmp.lt.s32.totalorder %v56, 200
      %v59 = vsel %vm58, %v40, 0.0
      %v60 = vadd.f32 %v57, %v59
      %61 = vst [vmem:[#allocation2] sm:$0x3] %v60
      %v62 = vld [vmem:[#allocation2] sm:$0x3]
      %vm63 = vcmask 1041408
      %v64 = vsel %vm63, %v62, 0.0
      %65 = vadd.xlane.f32.xlu0 %v64
      %v66 = vpop.xlane.xlu0 %65
      %v67 = vrot.slane %v66, 4
      %v68 = vadd.f32 %v66, %v67
      %v69 = vrot.slane %v68, 2
      %v70 = vadd.f32 %v68, %v69
      %v71 = vrot.slane %v70, 1
      %v72 = vadd.f32 %v70, %v71
      %s73 = vtos %v72
      %v74 = vrcp.pop 200.0
      %s75 = vtos %v74
      %s76 = smul.f32 %s73, %s75
      %s77 = scalar_lea.smem [#allocation6], 0
      %78 = sst [smem:[%s77]] %s76
    $region29: #{tpu_custom_call.1} parent=1 // pred_fallthru
      _
    // Predicated region
    $region30: #{tpu_custom_call.1} parent=1 // pred_check
      _
    $region31: #{tpu_custom_call.1} parent=1 // pred_check_branch
      %80 = sbr.rel (0) target = $region33
    $region32: #{tpu_custom_call.1} parent=1 // pred_region
      %s82 = ssub.s32 16, 16
      %83 = vsyncadd [#allocation5], %s82
      %86 = dma.smem_to_hbm [#allocation6], 16, %s3, [#allocation5]
    $region33: #{tpu_custom_call.1} parent=1 // pred_fallthru
      _
    // Predicated region
    $region34: #{tpu_custom_call.1} parent=1 // pred_check
      _
    $region35: #{tpu_custom_call.1} parent=1 // pred_check_branch
      %88 = sbr.rel (0) target = $region37
    $region36: #{tpu_custom_call.1} parent=1 // pred_region
      %89 = dma.done [#allocation5], 16
    $region37: #{tpu_custom_call.1} parent=1 // pred_fallthru
      _
    %90 = sfence
    %91 = vsyncpa [#allocation4], 1
    %92 = vsyncpa [#allocation5], 1

</llo_original>
